<compile_context>
chip_gen: v7x
topology: tpu7x:2x2x1
jax: 0.10.0
libtpu: 0.0.40
codegen_flags: <defaults>
</compile_context>

<pallas_src>
from typing import NamedTuple

import jax
import jax.numpy as jnp
from jax.experimental import pallas as pl
from jax.experimental.pallas import tpu as pltpu

LANE = 128


def _round_up(x, m):
    return (x + m - 1) // m * m


def _choose_tb(b8, tb_max):
    """Pick batch-tile rows: large tiles (amortize per-step overhead), minimal
    batch padding, and >=2 grid steps when b8 >= 16 so v7x's two TensorCores
    both get work under dimension_semantics=("parallel",)."""
    max_tb = min(tb_max, b8)
    if b8 >= 16:
        max_tb = min(max_tb, max(8, (b8 // 2) // 8 * 8))
    max_tb = max(8, max_tb // 8 * 8)
    best_tb, best_cost = 8, None
    for cand in range(8, max_tb + 1, 8):
        n_steps = -(-b8 // cand)
        # padded rows computed + per-step overhead (~rows-equivalent of 0.35us)
        cost = n_steps * cand + 64 * n_steps
        if best_cost is None or cost < best_cost:
            best_tb, best_cost = cand, cost
    return best_tb


def _predictor_kernel(obs_ref, act_ref,
                      w1_ref, b1_ref,
                      w2_ref, b2_ref,
                      w3_ref, b3_ref,
                      out_ref, x_scratch):
    """One batch tile: packed (obs | one-hot) layer-1 input + 3-layer MLP.

    obs_ref:   [TB, D_obs]  f32 (unpadded lane width)
    act_ref:   [TB, 1]      i32
    x_scratch: [TB, D_in_p] f32 (lane-padded layer-1 input, built in-kernel)
    """
    d_obs = obs_ref.shape[1]
    tb, d_in_p = x_scratch.shape

    act = act_ref[...]                                           # [TB, 1] i32
    lane = jax.lax.broadcasted_iota(jnp.int32, (tb, d_in_p), 1)

    # OneHot.transform placed at lane offset d_obs: packs torch.cat((obs,
    # onehot), -1) into a single 128-lane block.  Padded / out-of-range lanes
    # hit zero rows of W1 and contribute nothing.
    x_scratch[...] = (lane == act + d_obs).astype(x_scratch.dtype)
    # Overwrite lanes [0, d_obs) with obs (one-hot lanes are >= d_obs).
    x_scratch[:, :d_obs] = obs_ref[...].astype(x_scratch.dtype)

    wdt = w1_ref.dtype
    x = x_scratch[...].astype(wdt)                               # bf16 MXU operand

    # Layer 1 (single matmul — no split/concat)
    h1 = jnp.dot(x, w1_ref[...], preferred_element_type=jnp.float32)
    h1 = jnp.maximum(h1 + b1_ref[...], 0.0)                      # f32 VPU math

    # Layer 2
    h2 = jnp.dot(h1.astype(wdt), w2_ref[...], preferred_element_type=jnp.float32)
    h2 = jnp.maximum(h2 + b2_ref[...], 0.0)

    # Output layer; bf16 store halves output HBM traffic.
    out = jnp.dot(h2.astype(wdt), w3_ref[...], preferred_element_type=jnp.float32)
    out_ref[...] = (out + b3_ref[...]).astype(out_ref.dtype)


class PreparedParams(NamedTuple):
    w1: jax.Array   # [D_in_p, H_p]   bf16 (obs rows then action rows, padded)
    b1: jax.Array   # [1, H_p]        f32
    w2: jax.Array   # [H_p, H_p]      bf16
    b2: jax.Array   # [1, H_p]        f32
    w3: jax.Array   # [H_p, D_out_p]  bf16
    b3: jax.Array   # [1, D_out_p]    f32
    obs_dim: int
    action_n: int
    d_out: int


def prepare_params(params, obs_dim, action_n, weight_dtype=jnp.bfloat16):
    """Pad/cast parameters ONCE (hoisted out of the per-call path)."""
    w1, b1, w2, b2, w3, b3 = params
    d_in, hidden = w1.shape
    assert d_in == obs_dim + action_n
    d_out = w3.shape[1]

    d_in_p = _round_up(d_in, LANE)
    h_p = _round_up(hidden, LANE)
    d_out_p = _round_up(d_out, LANE)

    w1_p = jnp.zeros((d_in_p, h_p), weight_dtype).at[:d_in, :hidden].set(
        w1.astype(weight_dtype))
    w2_p = jnp.zeros((h_p, h_p), weight_dtype).at[:hidden, :hidden].set(
        w2.astype(weight_dtype))
    w3_p = jnp.zeros((h_p, d_out_p), weight_dtype).at[:hidden, :d_out].set(
        w3.astype(weight_dtype))
    b1_p = jnp.zeros((1, h_p), jnp.float32).at[:, :hidden].set(
        b1.reshape(1, -1).astype(jnp.float32))
    b2_p = jnp.zeros((1, h_p), jnp.float32).at[:, :hidden].set(
        b2.reshape(1, -1).astype(jnp.float32))
    b3_p = jnp.zeros((1, d_out_p), jnp.float32).at[:, :d_out].set(
        b3.reshape(1, -1).astype(jnp.float32))

    return PreparedParams(w1_p, b1_p, w2_p, b2_p, w3_p, b3_p,
                          obs_dim, action_n, d_out)


def predictor_forward(obs, actions, prepared: PreparedParams, *, tb_max=2048):
    """obs: [B, D_obs] f32; actions: [B, 1] int indices. Returns [B, d_out] f32."""
    B, d_obs = obs.shape
    assert d_obs == prepared.obs_dim
    d_in_p, h_p = prepared.w1.shape
    d_out_p = prepared.w3.shape[1]

    # --- batch tiling (minimize padding, keep >=2 steps for v7x when possible)
    b8 = _round_up(max(B, 1), 8)
    tb = _choose_tb(b8, tb_max)
    b_pad = _round_up(b8, tb)

    act_i32 = actions.astype(jnp.int32).reshape(B, 1)
    if b_pad != B:
        obs_in = jnp.pad(obs, ((0, b_pad - B), (0, 0)))
        act_in = jnp.pad(act_i32, ((0, b_pad - B), (0, 0)))
    else:
        obs_in, act_in = obs, act_i32

    grid = (b_pad // tb,)

    def tiled(shape):
        return pl.BlockSpec(shape, lambda i: (i, 0))

    def resident(shape):
        return pl.BlockSpec(shape, lambda i: (0, 0))

    wbytes = prepared.w1.dtype.itemsize
    flops = 2 * b_pad * h_p * (d_in_p + h_p + d_out_p)
    bytes_accessed = (
        b_pad * (d_obs * obs_in.dtype.itemsize + 4 + d_out_p * 2)
        + (d_in_p * h_p + h_p * h_p + h_p * d_out_p) * wbytes
        + (2 * h_p + d_out_p) * 4)
    cost = pl.CostEstimate(flops=int(flops), transcendentals=0,
                           bytes_accessed=int(bytes_accessed))

    out = pl.pallas_call(
        _predictor_kernel,
        out_shape=jax.ShapeDtypeStruct((b_pad, d_out_p), jnp.bfloat16),
        grid=grid,
        in_specs=[
            tiled((tb, d_obs)),           # obs tile (unpadded lanes, cast in-kernel)
            tiled((tb, 1)),               # action indices
            resident((d_in_p, h_p)),      # W1 (obs rows + action rows)
            resident((1, h_p)),           # b1
            resident((h_p, h_p)),         # W2
            resident((1, h_p)),           # b2
            resident((h_p, d_out_p)),     # W3
            resident((1, d_out_p)),       # b3
        ],
        out_specs=tiled((tb, d_out_p)),
        scratch_shapes=[pltpu.VMEM((tb, d_in_p), jnp.float32)],
        compiler_params=pltpu.CompilerParams(
            dimension_semantics=("parallel",)),
        cost_estimate=cost,
    )(obs_in, act_in, prepared.w1, prepared.b1, prepared.w2, prepared.b2,
      prepared.w3, prepared.b3)

    return out[:B, :prepared.d_out].astype(jnp.float32)


def make_params(key, in_dim, hidden, out_dim):
    """Deterministic synthetic parameters (orthogonal-init stand-in), f32."""
    k1, k2, k3 = jax.random.split(key, 3)
    w1 = jax.random.normal(k1, (in_dim, hidden), jnp.float32) / jnp.sqrt(in_dim)
    b1 = jnp.zeros((hidden,), jnp.float32)
    w2 = jax.random.normal(k2, (hidden, hidden), jnp.float32) / jnp.sqrt(hidden)
    b2 = jnp.zeros((hidden,), jnp.float32)
    w3 = jax.random.normal(k3, (hidden, out_dim), jnp.float32) / jnp.sqrt(hidden)
    b3 = jnp.zeros((out_dim,), jnp.float32)
    return (w1, b1, w2, b2, w3, b3)


def reference_forward(obs, actions, params, action_n):
    """Pure-JAX f32 reference mirroring the PyTorch semantics exactly."""
    w1, b1, w2, b2, w3, b3 = params
    onehot = jax.nn.one_hot(actions[:, 0], action_n, dtype=jnp.float32)
    x = jnp.concatenate([obs, onehot], axis=-1)
    h1 = jnp.maximum(x @ w1 + b1, 0.0)
    h2 = jnp.maximum(h1 @ w2 + b2, 0.0)
    return h2 @ w3 + b3


if __name__ == "__main__":
    # Small shapes consistent with the module's forward.
    B = 8              # batch (threads x agents, flattened)
    OBS_DIM = 18       # obs_space feature dim
    ACTION_N = 6       # action_space.n (one-hot width)
    HIDDEN = 32        # args.hidden_size
    CENT_OBS_DIM = 24  # cent_obs_space feature dim (PredictorNet output)

    key = jax.random.PRNGKey(0)
    k_obs, k_act, k_par, k_obs2, k_act2 = jax.random.split(key, 5)

    params = make_params(k_par, OBS_DIM + ACTION_N, HIDDEN, CENT_OBS_DIM)
    prepared = prepare_params(params, OBS_DIM, ACTION_N)   # hoisted, done once

    obs = jax.random.normal(k_obs, (B, OBS_DIM), jnp.float32)
    actions = jax.random.randint(k_act, (B, 1), 0, ACTION_N, jnp.int32)

    out = predictor_forward(obs, actions, prepared)
    out = jax.block_until_ready(out)
    ref = reference_forward(obs, actions, params, ACTION_N)
    assert out.shape == (B, CENT_OBS_DIM)
    # bf16 MXU operands / bf16 output store with f32 accumulation -> relaxed tol.
    assert jnp.allclose(out, ref, atol=6e-2, rtol=6e-2), (
        float(jnp.max(jnp.abs(out - ref))))

    # Second case: non-multiple-of-8 batch exercises the batch-pad + 2-step grid path.
    B2 = 13
    obs2 = jax.random.normal(k_obs2, (B2, OBS_DIM), jnp.float32)
    actions2 = jax.random.randint(k_act2, (B2, 1), 0, ACTION_N, jnp.int32)
    out2 = jax.block_until_ready(predictor_forward(obs2, actions2, prepared))
    ref2 = reference_forward(obs2, actions2, params, ACTION_N)
    assert out2.shape == (B2, CENT_OBS_DIM)
    assert jnp.allclose(out2, ref2, atol=6e-2, rtol=6e-2), (
        float(jnp.max(jnp.abs(out2 - ref2))))

    print("KERNEL_OK")
</pallas_src>

<mosaic_0001>
module attributes {stable_mosaic.version = 11 : i64} {
  func.func @_predictor_kernel(%arg0: i32, %arg1: memref<8x18xf32, #tpu.memory_space<vmem>>, %arg2: memref<8x1xi32, #tpu.memory_space<vmem>>, %arg3: memref<128x128xbf16, #tpu.memory_space<vmem>>, %arg4: memref<1x128xf32, #tpu.memory_space<vmem>>, %arg5: memref<128x128xbf16, #tpu.memory_space<vmem>>, %arg6: memref<1x128xf32, #tpu.memory_space<vmem>>, %arg7: memref<128x128xbf16, #tpu.memory_space<vmem>>, %arg8: memref<1x128xf32, #tpu.memory_space<vmem>>, %arg9: memref<8x128xbf16, #tpu.memory_space<vmem>>, %arg10: memref<8x128xf32, #tpu.memory_space<vmem>>) attributes {dimension_semantics = [#tpu.dimension_semantics<parallel>], iteration_bounds = array<i64: 1>, scalar_prefetch = 0 : i64, scratch_operands = 1 : i64, tpu.core_type = #tpu.core_type<tc>, window_params = [{transform_indices = @transform_0, window_bounds = array<i64: 8, 18>}, {transform_indices = @transform_1, window_bounds = array<i64: 8, 1>}, {pipeline_mode = #tpu.pipeline_mode<synchronous>, transform_indices = @transform_2, window_bounds = array<i64: 128, 128>}, {pipeline_mode = #tpu.pipeline_mode<synchronous>, transform_indices = @transform_3, window_bounds = array<i64: 1, 128>}, {pipeline_mode = #tpu.pipeline_mode<synchronous>, transform_indices = @transform_4, window_bounds = array<i64: 128, 128>}, {pipeline_mode = #tpu.pipeline_mode<synchronous>, transform_indices = @transform_5, window_bounds = array<i64: 1, 128>}, {pipeline_mode = #tpu.pipeline_mode<synchronous>, transform_indices = @transform_6, window_bounds = array<i64: 128, 128>}, {pipeline_mode = #tpu.pipeline_mode<synchronous>, transform_indices = @transform_7, window_bounds = array<i64: 1, 128>}, {transform_indices = @transform_8, window_bounds = array<i64: 8, 128>}]} {
    %c0 = arith.constant 0 : index
    %c0_0 = arith.constant 0 : index
    %0 = vector.load %arg2[%c0, %c0_0] : memref<8x1xi32, #tpu.memory_space<vmem>>, vector<8x1xi32>
    %1 = tpu.iota {dimensions = array<i32: 1>} : vector<8x128xi32>
    %c18_i32 = arith.constant 18 : i32
    %2 = vector.broadcast %c18_i32 : i32 to vector<8x1xi32>
    %3 = arith.addi %0, %2 : vector<8x1xi32>
    %4 = vector.broadcast %3 : vector<8x1xi32> to vector<8x128xi32>
    %5 = arith.cmpi eq, %1, %4 : vector<8x128xi32>
    %6 = arith.extui %5 : vector<8x128xi1> to vector<8x128xi32>
    %7 = arith.sitofp %6 : vector<8x128xi32> to vector<8x128xf32>
    %c0_1 = arith.constant 0 : index
    %c0_2 = arith.constant 0 : index
    %8 = vector.load %arg10[%c0_1, %c0_2] : memref<8x128xf32, #tpu.memory_space<vmem>>, vector<8x128xf32>
    tpu.vector_store %arg10[%c0_1, %c0_2], %7 {strides = array<i32>} : memref<8x128xf32, #tpu.memory_space<vmem>>, vector<8x128xf32>,
    %c0_3 = arith.constant 0 : index
    %c0_4 = arith.constant 0 : index
    %9 = vector.load %arg1[%c0_3, %c0_4] : memref<8x18xf32, #tpu.memory_space<vmem>>, vector<8x18xf32>
    %c0_5 = arith.constant 0 : index
    %c0_6 = arith.constant 0 : index
    %10 = vector.load %arg10[%c0_5, %c0_6] : memref<8x128xf32, #tpu.memory_space<vmem>>, vector<8x18xf32>
    tpu.vector_store %arg10[%c0_5, %c0_6], %9 {strides = array<i32>} : memref<8x128xf32, #tpu.memory_space<vmem>>, vector<8x18xf32>,
    %c0_7 = arith.constant 0 : index
    %c0_8 = arith.constant 0 : index
    %11 = vector.load %arg10[%c0_7, %c0_8] : memref<8x128xf32, #tpu.memory_space<vmem>>, vector<8x128xf32>
    %12 = arith.truncf %11 : vector<8x128xf32> to vector<8x128xbf16>
    %c0_9 = arith.constant 0 : index
    %c0_10 = arith.constant 0 : index
    %13 = vector.load %arg3[%c0_9, %c0_10] : memref<128x128xbf16, #tpu.memory_space<vmem>>, vector<128x128xbf16>
    %cst = arith.constant dense<0.000000e+00> : vector<8x128xf32>
    %14 = tpu.matmul %12, %13, %cst {dimension_numbers = #tpu.dot_dimension_numbers<[1], [0], [0], [1], [0, 0, 1, 1], [], []>} : vector<8x128xbf16>, vector<128x128xbf16>, vector<8x128xf32> -> vector<8x128xf32>
    %c0_11 = arith.constant 0 : index
    %c0_12 = arith.constant 0 : index
    %15 = vector.load %arg4[%c0_11, %c0_12] : memref<1x128xf32, #tpu.memory_space<vmem>>, vector<1x128xf32>
    %16 = vector.broadcast %15 : vector<1x128xf32> to vector<8x128xf32>
    %17 = arith.addf %14, %16 : vector<8x128xf32>
    %cst_13 = arith.constant 0.000000e+00 : f32
    %18 = vector.broadcast %cst_13 : f32 to vector<8x128xf32>
    %19 = arith.maximumf %17, %18 : vector<8x128xf32>
    %20 = arith.truncf %19 : vector<8x128xf32> to vector<8x128xbf16>
    %c0_14 = arith.constant 0 : index
    %c0_15 = arith.constant 0 : index
    %21 = vector.load %arg5[%c0_14, %c0_15] : memref<128x128xbf16, #tpu.memory_space<vmem>>, vector<128x128xbf16>
    %cst_16 = arith.constant dense<0.000000e+00> : vector<8x128xf32>
    %22 = tpu.matmul %20, %21, %cst_16 {dimension_numbers = #tpu.dot_dimension_numbers<[1], [0], [0], [1], [0, 0, 1, 1], [], []>} : vector<8x128xbf16>, vector<128x128xbf16>, vector<8x128xf32> -> vector<8x128xf32>
    %c0_17 = arith.constant 0 : index
    %c0_18 = arith.constant 0 : index
    %23 = vector.load %arg6[%c0_17, %c0_18] : memref<1x128xf32, #tpu.memory_space<vmem>>, vector<1x128xf32>
    %24 = vector.broadcast %23 : vector<1x128xf32> to vector<8x128xf32>
    %25 = arith.addf %22, %24 : vector<8x128xf32>
    %cst_19 = arith.constant 0.000000e+00 : f32
    %26 = vector.broadcast %cst_19 : f32 to vector<8x128xf32>
    %27 = arith.maximumf %25, %26 : vector<8x128xf32>
    %28 = arith.truncf %27 : vector<8x128xf32> to vector<8x128xbf16>
    %c0_20 = arith.constant 0 : index
    %c0_21 = arith.constant 0 : index
    %29 = vector.load %arg7[%c0_20, %c0_21] : memref<128x128xbf16, #tpu.memory_space<vmem>>, vector<128x128xbf16>
    %cst_22 = arith.constant dense<0.000000e+00> : vector<8x128xf32>
    %30 = tpu.matmul %28, %29, %cst_22 {dimension_numbers = #tpu.dot_dimension_numbers<[1], [0], [0], [1], [0, 0, 1, 1], [], []>} : vector<8x128xbf16>, vector<128x128xbf16>, vector<8x128xf32> -> vector<8x128xf32>
    %c0_23 = arith.constant 0 : index
    %c0_24 = arith.constant 0 : index
    %31 = vector.load %arg8[%c0_23, %c0_24] : memref<1x128xf32, #tpu.memory_space<vmem>>, vector<1x128xf32>
    %32 = vector.broadcast %31 : vector<1x128xf32> to vector<8x128xf32>
    %33 = arith.addf %30, %32 : vector<8x128xf32>
    %34 = arith.truncf %33 : vector<8x128xf32> to vector<8x128xbf16>
    %c0_25 = arith.constant 0 : index
    %c0_26 = arith.constant 0 : index
    %35 = vector.load %arg9[%c0_25, %c0_26] : memref<8x128xbf16, #tpu.memory_space<vmem>>, vector<8x128xbf16>
    tpu.vector_store %arg9[%c0_25, %c0_26], %34 {strides = array<i32>} : memref<8x128xbf16, #tpu.memory_space<vmem>>, vector<8x128xbf16>,
    return
  }
  func.func @transform_0(%arg0: i32) -> (i32, i32) {
    %c0_i32 = arith.constant 0 : i32
    %c0_i32_0 = arith.constant 0 : i32
    return %arg0, %c0_i32 : i32, i32
  }
  func.func @transform_1(%arg0: i32) -> (i32, i32) {
    %c0_i32 = arith.constant 0 : i32
    %c0_i32_0 = arith.constant 0 : i32
    return %arg0, %c0_i32 : i32, i32
  }
  func.func @transform_2(%arg0: i32) -> (i32, i32) {
    %c0_i32 = arith.constant 0 : i32
    %c0_i32_0 = arith.constant 0 : i32
    %c0_i32_1 = arith.constant 0 : i32
    return %c0_i32, %c0_i32_0 : i32, i32
  }
  func.func @transform_3(%arg0: i32) -> (i32, i32) {
    %c0_i32 = arith.constant 0 : i32
    %c0_i32_0 = arith.constant 0 : i32
    %c0_i32_1 = arith.constant 0 : i32
    return %c0_i32, %c0_i32_0 : i32, i32
  }
  func.func @transform_4(%arg0: i32) -> (i32, i32) {
    %c0_i32 = arith.constant 0 : i32
    %c0_i32_0 = arith.constant 0 : i32
    %c0_i32_1 = arith.constant 0 : i32
    return %c0_i32, %c0_i32_0 : i32, i32
  }
  func.func @transform_5(%arg0: i32) -> (i32, i32) {
    %c0_i32 = arith.constant 0 : i32
    %c0_i32_0 = arith.constant 0 : i32
    %c0_i32_1 = arith.constant 0 : i32
    return %c0_i32, %c0_i32_0 : i32, i32
  }
  func.func @transform_6(%arg0: i32) -> (i32, i32) {
    %c0_i32 = arith.constant 0 : i32
    %c0_i32_0 = arith.constant 0 : i32
    %c0_i32_1 = arith.constant 0 : i32
    return %c0_i32, %c0_i32_0 : i32, i32
  }
  func.func @transform_7(%arg0: i32) -> (i32, i32) {
    %c0_i32 = arith.constant 0 : i32
    %c0_i32_0 = arith.constant 0 : i32
    %c0_i32_1 = arith.constant 0 : i32
    return %c0_i32, %c0_i32_0 : i32, i32
  }
  func.func @transform_8(%arg0: i32) -> (i32, i32) {
    %c0_i32 = arith.constant 0 : i32
    %c0_i32_0 = arith.constant 0 : i32
    return %arg0, %c0_i32 : i32, i32
  }
}

</mosaic_0001>

<llo_original>
// kernel: tpu_custom_call.1
$region0: #{tpu_custom_call.1}
  #allocation0 [shape = 'u32[]', space=smem, size = 0x4, offset = 0x4, fixed_abs, tag = 'smem constant byte address 0x4 - core index']
  #allocation1 [shape = 'u32[144,128]{1,0:T(1,128)}', space=vmem, size = 0x12000, scoped, tag = 'internal scratch']
  #allocation2 [shape = 'f32[8,128]{1,0:T(8,128)}', space=vmem, size = 0x1000, scoped, tag = 'scratch operand']
  %s0 = inlined_call_operand.vmem [shape: f32[8,18], index: 0, kind: input, shape index: {}]
  %s1 = inlined_call_operand.vmem [shape: s32[8,1], index: 1, kind: input, shape index: {}]
  %s2 = inlined_call_operand.hbm [shape: bf16[128,128], index: 2, kind: input, shape index: {}]
  %s3 = inlined_call_operand.vmem [shape: f32[1,128], index: 3, kind: input, shape index: {}]
  %s4 = inlined_call_operand.hbm [shape: bf16[128,128], index: 4, kind: input, shape index: {}]
  %s5 = inlined_call_operand.vmem [shape: f32[1,128], index: 5, kind: input, shape index: {}]
  %s6 = inlined_call_operand.hbm [shape: bf16[128,128], index: 6, kind: input, shape index: {}]
  %s7 = inlined_call_operand.vmem [shape: f32[1,128], index: 7, kind: input, shape index: {}]
  %s8 = inlined_call_operand.hbm [shape: bf16[8,128], index: 8, kind: output, shape index: {}]
  %s9 = sld [smem:[#allocation0]]
  $region54: #{tpu_custom_call.1} parent=0
    _
  %s11 = ssub.s32 1, %s9
  %s12 = scalar_select 0, %s11, %s9
  $region1: #{tpu_custom_call.1} parent=0
    #allocation3 [shape = 'u8[32768]{0}', space=vmem, size = 0x8000, scoped, tag = 'input window, operand 2, single buffered']
    #allocation4 [shape = 's32[1]{0}', space=sflag, size = 0x4, scoped, tag = 'scoped memory for tpu_custom_call.1']
    #allocation5 [shape = 's32[1]{0}', space=sflag, size = 0x4, scoped, tag = 'scoped memory for tpu_custom_call.1']
    #allocation6 [shape = 'u8[32768]{0}', space=vmem, size = 0x8000, scoped, tag = 'input window, operand 4, single buffered']
    #allocation7 [shape = 's32[1]{0}', space=sflag, size = 0x4, scoped, tag = 'scoped memory for tpu_custom_call.1']
    #allocation8 [shape = 'u8[32768]{0}', space=vmem, size = 0x8000, scoped, tag = 'input window, operand 6, single buffered']
    #allocation9 [shape = 'u8[2048]{0}', space=vmem, size = 0x800, scoped, tag = 'output window, operand 0, single buffered']
    %13 = vsyncpa [#allocation4], 0
    %14 = vsyncpa [#allocation7], 0
    %15 = vsyncpa [#allocation5], 0
    // Predicated region
    $region2: #{tpu_custom_call.1} parent=1 // pred_check
      _
    $region3: #{tpu_custom_call.1} parent=1 // pred_check_branch
      %17 = sbr.rel (0) target = $region5
    $region4: #{tpu_custom_call.1} parent=1 // pred_region
      _
    $region5: #{tpu_custom_call.1} parent=1 // pred_fallthru
      _
    // Predicated region
    $region6: #{tpu_custom_call.1} parent=1 // pred_check
      _
    $region7: #{tpu_custom_call.1} parent=1 // pred_check_branch
      %19 = sbr.rel (0) target = $region9
    $region8: #{tpu_custom_call.1} parent=1 // pred_region
      _
    $region9: #{tpu_custom_call.1} parent=1 // pred_fallthru
      _
    // Predicated region
    $region10: #{tpu_custom_call.1} parent=1 // pred_check
      _
    $region11: #{tpu_custom_call.1} parent=1 // pred_check_branch
      %21 = sbr.rel (0) target = $region13
    $region12: #{tpu_custom_call.1} parent=1 // pred_region
      %s23 = ssub.s32 1024, 1024
      %24 = vsyncadd [#allocation4], %s23
      %s25 = sshll.u32 [#allocation3], 4
      %s26 = int_to_ptr.vmem [resolvable:$true] %s25
      %31 = dma.hbm_to_vmem [thread:$0]  %s2, 1024, %s26, [#allocation4], 64, 64, 4
    $region13: #{tpu_custom_call.1} parent=1 // pred_fallthru
      _
    // Predicated region
    $region14: #{tpu_custom_call.1} parent=1 // pred_check
      _
    $region15: #{tpu_custom_call.1} parent=1 // pred_check_branch
      %33 = sbr.rel (0) target = $region17
    $region16: #{tpu_custom_call.1} parent=1 // pred_region
      _
    $region17: #{tpu_custom_call.1} parent=1 // pred_fallthru
      _
    // Predicated region
    $region18: #{tpu_custom_call.1} parent=1 // pred_check
      _
    $region19: #{tpu_custom_call.1} parent=1 // pred_check_branch
      %35 = sbr.rel (0) target = $region21
    $region20: #{tpu_custom_call.1} parent=1 // pred_region
      %s37 = ssub.s32 1024, 1024
      %38 = vsyncadd [#allocation7], %s37
      %s39 = sshll.u32 [#allocation6], 4
      %s40 = int_to_ptr.vmem [resolvable:$true] %s39
      %45 = dma.hbm_to_vmem [thread:$0]  %s4, 1024, %s40, [#allocation7], 64, 64, 4
    $region21: #{tpu_custom_call.1} parent=1 // pred_fallthru
      _
    // Predicated region
    $region22: #{tpu_custom_call.1} parent=1 // pred_check
      _
    $region23: #{tpu_custom_call.1} parent=1 // pred_check_branch
      %47 = sbr.rel (0) target = $region25
    $region24: #{tpu_custom_call.1} parent=1 // pred_region
      _
    $region25: #{tpu_custom_call.1} parent=1 // pred_fallthru
      _
    // Predicated region
    $region26: #{tpu_custom_call.1} parent=1 // pred_check
      _
    $region27: #{tpu_custom_call.1} parent=1 // pred_check_branch
      %49 = sbr.rel (0) target = $region29
    $region28: #{tpu_custom_call.1} parent=1 // pred_region
      %s51 = ssub.s32 1024, 1024
      %52 = vsyncadd [#allocation7], %s51
      %s53 = sshll.u32 [#allocation8], 4
      %s54 = int_to_ptr.vmem [resolvable:$true] %s53
      %59 = dma.hbm_to_vmem [thread:$0]  %s6, 1024, %s54, [#allocation7], 64, 64, 4
    $region29: #{tpu_custom_call.1} parent=1 // pred_fallthru
      _
    // Predicated region
    $region30: #{tpu_custom_call.1} parent=1 // pred_check
      _
    $region31: #{tpu_custom_call.1} parent=1 // pred_check_branch
      %61 = sbr.rel (0) target = $region33
    $region32: #{tpu_custom_call.1} parent=1 // pred_region
      _
    $region33: #{tpu_custom_call.1} parent=1 // pred_fallthru
      _
    // Predicated region
    $region34: #{tpu_custom_call.1} parent=1 // pred_check
      _
    $region35: #{tpu_custom_call.1} parent=1 // pred_check_branch
      %63 = sbr.rel (0) target = $region37
    $region36: #{tpu_custom_call.1} parent=1 // pred_region
      %64 = dma.done [#allocation4], 1024
    $region37: #{tpu_custom_call.1} parent=1 // pred_fallthru
      _
    // Predicated region
    $region38: #{tpu_custom_call.1} parent=1 // pred_check
      _
    $region39: #{tpu_custom_call.1} parent=1 // pred_check_branch
      %66 = sbr.rel (0) target = $region41
    $region40: #{tpu_custom_call.1} parent=1 // pred_region
      %67 = dma.done [#allocation7], 1024
    $region41: #{tpu_custom_call.1} parent=1 // pred_fallthru
      _
    // Predicated region
    $region42: #{tpu_custom_call.1} parent=1 // pred_check
      _
    $region43: #{tpu_custom_call.1} parent=1 // pred_check_branch
      %69 = sbr.rel (0) target = $region45
    $region44: #{tpu_custom_call.1} parent=1 // pred_region
      %70 = dma.done [#allocation7], 1024
    $region45: #{tpu_custom_call.1} parent=1 // pred_fallthru
      _
    %v72 = vld [vmem:[%s1] sm:$0xff]
    %v73 = vlaneseq
    %v74 = vand.u32 %v73, 127
    %v75 = vadd.s32 %v72, 18
    %76 = vset.pattern.permute.xlu0 0
    %77 = vperm.xlu0 %76, %v75
    %v78 = vpop.permute.xlu0 %77
    %vm79 = vcmp.eq.s32.totalorder %v74, %v78
    %v80 = vsel %vm79, 1, 0
    %v81 = vcvt.s32.f32 %v80
    %82 = vst [vmem:[#allocation2] sm:$0xff] %v81
    %v83 = vld [vmem:[%s0] sm:$0xff]
    %vm84 = vcmask 146432
    %85 = vst.msk [vmem:[#allocation2] sm:$0xff] %vm84, %v83
    %v86 = vld [vmem:[#allocation2] sm:$0xff]
    %v87 = vpack.c.bf16 %v86, %v86
    %v88 = vld [vmem:[#allocation3] sm:$0xf]
    %v89 = vld [vmem:[#allocation3 + $0x4] sm:$0xf]
    %v90 = vld [vmem:[#allocation3 + $0x8] sm:$0xf]
    %v91 = vld [vmem:[#allocation3 + $0xc] sm:$0xf]
    %v92 = vld [vmem:[#allocation3 + $0x10] sm:$0xf]
    %v93 = vld [vmem:[#allocation3 + $0x14] sm:$0xf]
    %v94 = vld [vmem:[#allocation3 + $0x18] sm:$0xf]
    %v95 = vld [vmem:[#allocation3 + $0x1c] sm:$0xf]
    %v96 = vld [vmem:[#allocation3 + $0x20] sm:$0xf]
    %v97 = vld [vmem:[#allocation3 + $0x24] sm:$0xf]
    %v98 = vld [vmem:[#allocation3 + $0x28] sm:$0xf]
    %v99 = vld [vmem:[#allocation3 + $0x2c] sm:$0xf]
    %v100 = vld [vmem:[#allocation3 + $0x30] sm:$0xf]
    %v101 = vld [vmem:[#allocation3 + $0x34] sm:$0xf]
    %v102 = vld [vmem:[#allocation3 + $0x38] sm:$0xf]
    %v103 = vld [vmem:[#allocation3 + $0x3c] sm:$0xf]
    %v104 = vld [vmem:[%s3] sm:$0x1]
    %v106 = vlaneseq
    %v107 = vshrl.u32 %v106, 7
    %v108 = vsub.s32 0, %v107
    %v109 = vrot.slane %v104, %v108
    %v127 = vunpack.c.l.b16 %v88
    %v128 = vunpack.c.l.b16 %v89
    %v129 = vunpack.c.l.b16 %v90
    %v130 = vunpack.c.l.b16 %v91
    %v131 = vunpack.c.l.b16 %v92
    %v132 = vunpack.c.l.b16 %v93
    %v133 = vunpack.c.l.b16 %v94
    %v134 = vunpack.c.l.b16 %v95
    %v135 = vunpack.c.l.b16 %v96
    %v136 = vunpack.c.l.b16 %v97
    %v137 = vunpack.c.l.b16 %v98
    %v138 = vunpack.c.l.b16 %v99
    %v139 = vunpack.c.l.b16 %v100
    %v140 = vunpack.c.l.b16 %v101
    %v141 = vunpack.c.l.b16 %v102
    %v142 = vunpack.c.l.b16 %v103
    %v143 = vpack.c.b16 %v128, %v127
    %v144 = vpack.c.b16 %v130, %v129
    %v145 = vpack.c.b16 %v132, %v131
    %v146 = vpack.c.b16 %v134, %v133
    %v147 = vpack.c.b16 %v136, %v135
    %v148 = vpack.c.b16 %v138, %v137
    %v149 = vpack.c.b16 %v140, %v139
    %v150 = vpack.c.b16 %v142, %v141
    %159 = vmatprep.subr.bf16.mxu0 0
    %160 = vmatpush1.bf16.msra.mxu0 %v143
    %161 = vmatprep.subr.bf16.mxu0 0
    %162 = vmatpush1.bf16.msra.mxu0 %v144
    %163 = vmatprep.subr.bf16.mxu0 0
    %164 = vmatpush1.bf16.msra.mxu0 %v145
    %165 = vmatprep.subr.bf16.mxu0 0
    %166 = vmatpush1.bf16.msra.mxu0 %v146
    %167 = vmatprep.subr.bf16.mxu0 0
    %168 = vmatpush1.bf16.msra.mxu0 %v147
    %169 = vmatprep.subr.bf16.mxu0 0
    %170 = vmatpush1.bf16.msra.mxu0 %v148
    %171 = vmatprep.subr.bf16.mxu0 0
    %172 = vmatpush1.bf16.msra.mxu0 %v149
    %173 = vmatprep.subr.bf16.mxu0 0
    %174 = vmatpush1.bf16.msra.mxu0 %v150
    %175 = vmatprep.subr.bf16.mxu0 0
    %176 = vmatpush1.bf16.msra.mxu0 0
    %177 = vmatprep.subr.bf16.mxu0 0
    %178 = vmatpush1.bf16.msra.mxu0 0
    %179 = vmatprep.subr.bf16.mxu0 0
    %180 = vmatpush1.bf16.msra.mxu0 0
    %181 = vmatprep.subr.bf16.mxu0 0
    %182 = vmatpush1.bf16.msra.mxu0 0
    %183 = vmatprep.subr.bf16.mxu0 0
    %184 = vmatpush1.bf16.msra.mxu0 0
    %185 = vmatprep.subr.bf16.mxu0 0
    %186 = vmatpush1.bf16.msra.mxu0 0
    %187 = vmatprep.subr.bf16.mxu0 0
    %188 = vmatpush1.bf16.msra.mxu0 0
    %189 = vmatprep.subr.bf16.mxu0 0
    %190 = vmatpush1.bf16.msra.mxu0 0
    %191 = vmatprep.mubr.bf16.mxu0 0
    %192 = vmatmul.mubr.bf16.gmra.mrb[0].mxu0 %v87
    %v193 = vpop.f32.mrb[0].mxu0
    %v194 = vadd.f32 %v109, %v193
    %v195 = vpop.f32.mrb[0].mxu0
    %v196 = vpop.f32.mrb[0].mxu0
    %v197 = vpop.f32.mrb[0].mxu0
    %198 = vdwg.mxu0
    %v199 = vmax.f32 %v194, 0.0
    %v200 = vpack.c.bf16 %v199, %v199
    %v201 = vld [vmem:[#allocation6] sm:$0xf]
    %v202 = vld [vmem:[#allocation6 + $0x4] sm:$0xf]
    %v203 = vld [vmem:[#allocation6 + $0x8] sm:$0xf]
    %v204 = vld [vmem:[#allocation6 + $0xc] sm:$0xf]
    %v205 = vld [vmem:[#allocation6 + $0x10] sm:$0xf]
    %v206 = vld [vmem:[#allocation6 + $0x14] sm:$0xf]
    %v207 = vld [vmem:[#allocation6 + $0x18] sm:$0xf]
    %v208 = vld [vmem:[#allocation6 + $0x1c] sm:$0xf]
    %v209 = vld [vmem:[#allocation6 + $0x20] sm:$0xf]
    %v210 = vld [vmem:[#allocation6 + $0x24] sm:$0xf]
    %v211 = vld [vmem:[#allocation6 + $0x28] sm:$0xf]
    %v212 = vld [vmem:[#allocation6 + $0x2c] sm:$0xf]
    %v213 = vld [vmem:[#allocation6 + $0x30] sm:$0xf]
    %v214 = vld [vmem:[#allocation6 + $0x34] sm:$0xf]
    %v215 = vld [vmem:[#allocation6 + $0x38] sm:$0xf]
    %v216 = vld [vmem:[#allocation6 + $0x3c] sm:$0xf]
    %v217 = vld [vmem:[%s5] sm:$0x1]
    %v219 = vlaneseq
    %v220 = vshrl.u32 %v219, 7
    %v221 = vsub.s32 0, %v220
    %v222 = vrot.slane %v217, %v221
    %v240 = vunpack.c.l.b16 %v201
    %v241 = vunpack.c.l.b16 %v202
    %v242 = vunpack.c.l.b16 %v203
    %v243 = vunpack.c.l.b16 %v204
    %v244 = vunpack.c.l.b16 %v205
    %v245 = vunpack.c.l.b16 %v206
    %v246 = vunpack.c.l.b16 %v207
    %v247 = vunpack.c.l.b16 %v208
    %v248 = vunpack.c.l.b16 %v209
    %v249 = vunpack.c.l.b16 %v210
    %v250 = vunpack.c.l.b16 %v211
    %v251 = vunpack.c.l.b16 %v212
    %v252 = vunpack.c.l.b16 %v213
    %v253 = vunpack.c.l.b16 %v214
    %v254 = vunpack.c.l.b16 %v215
    %v255 = vunpack.c.l.b16 %v216
    %v256 = vpack.c.b16 %v241, %v240
    %v257 = vpack.c.b16 %v243, %v242
    %v258 = vpack.c.b16 %v245, %v244
    %v259 = vpack.c.b16 %v247, %v246
    %v260 = vpack.c.b16 %v249, %v248
    %v261 = vpack.c.b16 %v251, %v250
    %v262 = vpack.c.b16 %v253, %v252
    %v263 = vpack.c.b16 %v255, %v254
    %272 = vmatprep.subr.bf16.mxu0 0
    %273 = vmatpush1.bf16.msra.mxu0 %v256
    %274 = vmatprep.subr.bf16.mxu0 0
    %275 = vmatpush1.bf16.msra.mxu0 %v257
    %276 = vmatprep.subr.bf16.mxu0 0
    %277 = vmatpush1.bf16.msra.mxu0 %v258
    %278 = vmatprep.subr.bf16.mxu0 0
    %279 = vmatpush1.bf16.msra.mxu0 %v259
    %280 = vmatprep.subr.bf16.mxu0 0
    %281 = vmatpush1.bf16.msra.mxu0 %v260
    %282 = vmatprep.subr.bf16.mxu0 0
    %283 = vmatpush1.bf16.msra.mxu0 %v261
    %284 = vmatprep.subr.bf16.mxu0 0
    %285 = vmatpush1.bf16.msra.mxu0 %v262
    %286 = vmatprep.subr.bf16.mxu0 0
    %287 = vmatpush1.bf16.msra.mxu0 %v263
    %288 = vmatprep.subr.bf16.mxu0 0
    %289 = vmatpush1.bf16.msra.mxu0 0
    %290 = vmatprep.subr.bf16.mxu0 0
    %291 = vmatpush1.bf16.msra.mxu0 0
    %292 = vmatprep.subr.bf16.mxu0 0
    %293 = vmatpush1.bf16.msra.mxu0 0
    %294 = vmatprep.subr.bf16.mxu0 0
    %295 = vmatpush1.bf16.msra.mxu0 0
    %296 = vmatprep.subr.bf16.mxu0 0
    %297 = vmatpush1.bf16.msra.mxu0 0
    %298 = vmatprep.subr.bf16.mxu0 0
    %299 = vmatpush1.bf16.msra.mxu0 0
    %300 = vmatprep.subr.bf16.mxu0 0
    %301 = vmatpush1.bf16.msra.mxu0 0
    %302 = vmatprep.subr.bf16.mxu0 0
    %303 = vmatpush1.bf16.msra.mxu0 0
    %304 = vmatprep.mubr.bf16.mxu0 0
    %305 = vmatmul.mubr.bf16.gmra.mrb[0].mxu0 %v200
    %v306 = vpop.f32.mrb[0].mxu0
    %v307 = vadd.f32 %v222, %v306
    %v308 = vpop.f32.mrb[0].mxu0
    %v309 = vpop.f32.mrb[0].mxu0
    %v310 = vpop.f32.mrb[0].mxu0
    %311 = vdwg.mxu0
    %v312 = vmax.f32 %v307, 0.0
    %v313 = vpack.c.bf16 %v312, %v312
    %v314 = vld [vmem:[#allocation8] sm:$0xf]
    %v315 = vld [vmem:[#allocation8 + $0x4] sm:$0xf]
    %v316 = vld [vmem:[#allocation8 + $0x8] sm:$0xf]
    %v317 = vld [vmem:[#allocation8 + $0xc] sm:$0xf]
    %v318 = vld [vmem:[#allocation8 + $0x10] sm:$0xf]
    %v319 = vld [vmem:[#allocation8 + $0x14] sm:$0xf]
    %v320 = vld [vmem:[#allocation8 + $0x18] sm:$0xf]
    %v321 = vld [vmem:[#allocation8 + $0x1c] sm:$0xf]
    %v322 = vld [vmem:[#allocation8 + $0x20] sm:$0xf]
    %v323 = vld [vmem:[#allocation8 + $0x24] sm:$0xf]
    %v324 = vld [vmem:[#allocation8 + $0x28] sm:$0xf]
    %v325 = vld [vmem:[#allocation8 + $0x2c] sm:$0xf]
    %v326 = vld [vmem:[#allocation8 + $0x30] sm:$0xf]
    %v327 = vld [vmem:[#allocation8 + $0x34] sm:$0xf]
    %v328 = vld [vmem:[#allocation8 + $0x38] sm:$0xf]
    %v329 = vld [vmem:[#allocation8 + $0x3c] sm:$0xf]
    %v330 = vld [vmem:[%s7] sm:$0x1]
    %v332 = vlaneseq
    %v333 = vshrl.u32 %v332, 7
    %v334 = vsub.s32 0, %v333
    %v335 = vrot.slane %v330, %v334
    %v353 = vunpack.c.l.b16 %v314
    %v354 = vunpack.c.l.b16 %v315
    %v355 = vunpack.c.l.b16 %v316
    %v356 = vunpack.c.l.b16 %v317
    %v357 = vunpack.c.l.b16 %v318
    %v358 = vunpack.c.l.b16 %v319
    %v359 = vunpack.c.l.b16 %v320
    %v360 = vunpack.c.l.b16 %v321
    %v361 = vunpack.c.l.b16 %v322
    %v362 = vunpack.c.l.b16 %v323
    %v363 = vunpack.c.l.b16 %v324
    %v364 = vunpack.c.l.b16 %v325
    %v365 = vunpack.c.l.b16 %v326
    %v366 = vunpack.c.l.b16 %v327
    %v367 = vunpack.c.l.b16 %v328
    %v368 = vunpack.c.l.b16 %v329
    %v369 = vpack.c.b16 %v354, %v353
    %v370 = vpack.c.b16 %v356, %v355
    %v371 = vpack.c.b16 %v358, %v357
    %v372 = vpack.c.b16 %v360, %v359
    %v373 = vpack.c.b16 %v362, %v361
    %v374 = vpack.c.b16 %v364, %v363
    %v375 = vpack.c.b16 %v366, %v365
    %v376 = vpack.c.b16 %v368, %v367
    %385 = vmatprep.subr.bf16.mxu0 0
    %386 = vmatpush1.bf16.msra.mxu0 %v369
    %387 = vmatprep.subr.bf16.mxu0 0
    %388 = vmatpush1.bf16.msra.mxu0 %v370
    %389 = vmatprep.subr.bf16.mxu0 0
    %390 = vmatpush1.bf16.msra.mxu0 %v371
    %391 = vmatprep.subr.bf16.mxu0 0
    %392 = vmatpush1.bf16.msra.mxu0 %v372
    %393 = vmatprep.subr.bf16.mxu0 0
    %394 = vmatpush1.bf16.msra.mxu0 %v373
    %395 = vmatprep.subr.bf16.mxu0 0
    %396 = vmatpush1.bf16.msra.mxu0 %v374
    %397 = vmatprep.subr.bf16.mxu0 0
    %398 = vmatpush1.bf16.msra.mxu0 %v375
    %399 = vmatprep.subr.bf16.mxu0 0
    %400 = vmatpush1.bf16.msra.mxu0 %v376
    %401 = vmatprep.subr.bf16.mxu0 0
    %402 = vmatpush1.bf16.msra.mxu0 0
    %403 = vmatprep.subr.bf16.mxu0 0
    %404 = vmatpush1.bf16.msra.mxu0 0
    %405 = vmatprep.subr.bf16.mxu0 0
    %406 = vmatpush1.bf16.msra.mxu0 0
    %407 = vmatprep.subr.bf16.mxu0 0
    %408 = vmatpush1.bf16.msra.mxu0 0
    %409 = vmatprep.subr.bf16.mxu0 0
    %410 = vmatpush1.bf16.msra.mxu0 0
    %411 = vmatprep.subr.bf16.mxu0 0
    %412 = vmatpush1.bf16.msra.mxu0 0
    %413 = vmatprep.subr.bf16.mxu0 0
    %414 = vmatpush1.bf16.msra.mxu0 0
    %415 = vmatprep.subr.bf16.mxu0 0
    %416 = vmatpush1.bf16.msra.mxu0 0
    %417 = vmatprep.mubr.bf16.mxu0 0
    %418 = vmatmul.mubr.bf16.gmra.mrb[0].mxu0 %v313
    %v419 = vpop.f32.mrb[0].mxu0
    %v420 = vadd.f32 %v335, %v419
    %v421 = vpop.f32.mrb[0].mxu0
    %v422 = vpop.f32.mrb[0].mxu0
    %v423 = vpop.f32.mrb[0].mxu0
    %424 = vdwg.mxu0
    %v425 = vpack.c.bf16 %v420, %v420
    %426 = vst [vmem:[#allocation9] sm:$0xf] %v425
    // Predicated region
    $region46: #{tpu_custom_call.1} parent=1 // pred_check
      _
    $region47: #{tpu_custom_call.1} parent=1 // pred_check_branch
      %428 = sbr.rel (0) target = $region49
    $region48: #{tpu_custom_call.1} parent=1 // pred_region
      %s430 = ssub.s32 64, 64
      %431 = vsyncadd [#allocation5], %s430
      %s433 = sshll.u32 [#allocation9], 4
      %s434 = int_to_ptr.vmem [resolvable:$true] %s433
      %436 = dma.vmem_to_hbm [thread:$0]  %s434, 64, %s8, [#allocation5]
    $region49: #{tpu_custom_call.1} parent=1 // pred_fallthru
      _
    // Predicated region
    $region50: #{tpu_custom_call.1} parent=1 // pred_check
      _
    $region51: #{tpu_custom_call.1} parent=1 // pred_check_branch
      %438 = sbr.rel (0) target = $region53
    $region52: #{tpu_custom_call.1} parent=1 // pred_region
      %439 = dma.done [#allocation5], 64
    $region53: #{tpu_custom_call.1} parent=1 // pred_fallthru
      _
    %440 = vsyncpa [#allocation4], 1
    %441 = vsyncpa [#allocation7], 1
    %442 = vsyncpa [#allocation5], 1

</llo_original>
